<compile_context>
chip_gen: v7x
topology: tpu7x:2x2x1
jax: 0.10.0
libtpu: 0.0.40
codegen_flags: <defaults>
</compile_context>

<pallas_src>
import functools

import jax
import jax.numpy as jnp
from jax.experimental import pallas as pl
from jax.experimental.pallas import tpu as pltpu


def _round_up(x, m):
    return ((x + m - 1) // m) * m


def _agent_forward_kernel(state_ref, trunk_ref, head_ref, out_ref, *,
                          state_dim, hidden_pad, action_dim):
    S, Hp, A = state_dim, hidden_pad, action_dim

    # f32 state tile -> bf16 for the MXU (in-kernel cast, no wrapper pass).
    x = state_ref[...].astype(jnp.bfloat16)                 # (bt, S)

    # shared trunk: h = tanh(x @ W1 + b1); W1 columns zero-padded to Hp=128 so
    # h is lane-dense (padded columns -> tanh(0) = 0).
    w1 = trunk_ref[:S, :]                                    # (S, Hp) bf16
    b1 = trunk_ref[S:S + 1, :].astype(jnp.float32)           # (1, Hp)
    h = jnp.tanh(jnp.dot(x, w1, preferred_element_type=jnp.float32) + b1)

    # fused heads: z = h @ [Wa | Wv | 0] + [ba | bv | 0]  -> (bt, P) f32
    wh = head_ref[:Hp, :]                                    # (Hp, P) bf16
    bh = head_ref[Hp:Hp + 1, :].astype(jnp.float32)          # (1, P)
    z = jnp.dot(h.astype(jnp.bfloat16), wh,
                preferred_element_type=jnp.float32) + bh

    # softmax over the first A (real) action lanes only; padded lanes -> 0.
    # Elementwise math stays f32 (v5e VPU/EUP have no bf16); exact divide so
    # the probabilities sum to 1 for downstream sampling / log-probs.
    lane = jax.lax.broadcasted_iota(jnp.int32, z.shape, 1)
    masked = jnp.where(lane < A, z, jnp.float32(-1e30))
    m = jnp.max(masked, axis=-1, keepdims=True)
    e = jnp.exp(masked - m)
    denom = jnp.sum(e, axis=-1, keepdims=True)
    probs = e / denom

    # one lane-dense unmasked store: cols [0,A) = probs, col A = value, rest ~0.
    out_ref[...] = jnp.where(lane == A, z, probs).astype(out_ref.dtype)


def pack_params(w1, b1, wa, ba, wv, bv):
    """One-time packing of the agent parameters into two bf16 VMEM-friendly
    arrays (bias folded as an extra row, hidden dim padded to 128, row counts
    rounded to 16 sublanes). Call once at init, NOT per forward."""
    S, H = w1.shape
    A = wa.shape[1]
    Hp = _round_up(H, 128)                       # lane-dense trunk output
    P = _round_up(A + 1, 128)                    # lane-dense fused-head width
    trunk_rows = _round_up(S + 1, 16)            # bf16 packs 16 sublanes/vreg
    head_rows = _round_up(Hp + 1, 16)

    trunk = jnp.zeros((trunk_rows, Hp), jnp.float32)
    trunk = trunk.at[:S, :H].set(w1).at[S, :H].set(b1.reshape(-1))
    trunk = trunk.astype(jnp.bfloat16)

    head = jnp.zeros((head_rows, P), jnp.float32)
    head = (head.at[:H, :A].set(wa)
                .at[:H, A].set(wv.reshape(-1))
                .at[Hp, :A].set(ba.reshape(-1))
                .at[Hp, A].set(bv.reshape(())))
    head = head.astype(jnp.bfloat16)
    return trunk, head


@functools.partial(jax.jit, static_argnames=("action_dim", "batch_tile"))
def agent_forward(state, trunk, head, *, action_dim, batch_tile=1024):
    """Fused actor-critic forward. Returns (action_probs (B, A), value (B, 1)).

    `trunk` / `head` are the pre-packed bf16 parameter arrays from
    pack_params(); the only per-call work is this single pallas_call."""
    B, S = state.shape
    trunk_rows, Hp = trunk.shape
    head_rows, P = head.shape
    A = action_dim

    # Single grid step for small batches; tile only when B exceeds batch_tile.
    bt = min(batch_tile, _round_up(B, 16))
    Bp = _round_up(B, bt)
    x = state
    if Bp != B:
        x = jnp.pad(x, ((0, Bp - B), (0, 0)))
    steps = Bp // bt
    # Multi-core ("parallel") split only pays off when each TC gets a full
    # tile; a single tile stays on one core (no cross-core launch/sync).
    semantics = ("parallel",) if steps >= 2 else ("arbitrary",)

    kernel = functools.partial(_agent_forward_kernel,
                               state_dim=S, hidden_pad=Hp, action_dim=A)

    out = pl.pallas_call(
        kernel,
        out_shape=jax.ShapeDtypeStruct((Bp, P), jnp.bfloat16),
        grid=(steps,),
        in_specs=[
            pl.BlockSpec((bt, S), lambda i: (i, 0)),          # f32 state tile
            pl.BlockSpec((trunk_rows, Hp), lambda i: (0, 0)), # VMEM-resident
            pl.BlockSpec((head_rows, P), lambda i: (0, 0)),   # VMEM-resident
        ],
        out_specs=pl.BlockSpec((bt, P), lambda i: (i, 0)),
        compiler_params=pltpu.CompilerParams(
            dimension_semantics=semantics),
    )(x, trunk, head)

    probs = out[:B, :A].astype(jnp.float32)
    value = out[:B, A:A + 1].astype(jnp.float32)
    return probs, value


def init_params(key, state_dim, hidden_dim, action_dim):
    k1, k2, k3 = jax.random.split(key, 3)
    s1 = 1.0 / jnp.sqrt(state_dim)
    s2 = 1.0 / jnp.sqrt(hidden_dim)
    w1 = jax.random.uniform(k1, (state_dim, hidden_dim), jnp.float32, -s1, s1)
    b1 = jnp.zeros((1, hidden_dim), jnp.float32)
    wa = jax.random.uniform(k2, (hidden_dim, action_dim), jnp.float32, -s2, s2)
    ba = jnp.zeros((1, action_dim), jnp.float32)
    wv = jax.random.uniform(k3, (hidden_dim, 1), jnp.float32, -s2, s2)
    bv = jnp.zeros((1, 1), jnp.float32)
    return w1, b1, wa, ba, wv, bv


if __name__ == "__main__":
    batch = 256            # now a single 256-row grid step (was 2 x 128)
    state_dim = 32
    hidden_dim = 64
    action_dim = 8

    key = jax.random.PRNGKey(0)
    k_state, k_params = jax.random.split(key)

    state = jax.random.normal(k_state, (batch, state_dim), jnp.float32)
    params = init_params(k_params, state_dim, hidden_dim, action_dim)

    # Pack parameters ONCE; per-call cost is just the jitted pallas_call.
    trunk, head = pack_params(*params)

    probs, value = agent_forward(state, trunk, head, action_dim=action_dim)
    jax.block_until_ready((probs, value))

    # pure-JAX f32 reference (kernel uses bf16 weights/activations/output with
    # f32 MXU accumulation, so tolerances are loosened accordingly).
    w1, b1, wa, ba, wv, bv = params
    h_ref = jnp.tanh(state @ w1 + b1)
    probs_ref = jax.nn.softmax(h_ref @ wa + ba, axis=-1)
    value_ref = h_ref @ wv + bv

    assert probs.shape == (batch, action_dim)
    assert value.shape == (batch, 1)
    assert jnp.allclose(probs, probs_ref, atol=2e-2)
    assert jnp.allclose(value, value_ref, atol=5e-2)
    assert jnp.allclose(jnp.sum(probs, axis=-1), 1.0, atol=1e-2)

    print("KERNEL_OK")
</pallas_src>

<mosaic_0001>
module attributes {stable_mosaic.version = 11 : i64} {
  func.func @_agent_forward_kernel(%arg0: i32, %arg1: memref<256x32xf32, #tpu.memory_space<vmem>>, %arg2: memref<48x128xbf16, #tpu.memory_space<vmem>>, %arg3: memref<144x128xbf16, #tpu.memory_space<vmem>>, %arg4: memref<256x128xbf16, #tpu.memory_space<vmem>>) attributes {dimension_semantics = [#tpu.dimension_semantics<arbitrary>], iteration_bounds = array<i64: 1>, scalar_prefetch = 0 : i64, scratch_operands = 0 : i64, tpu.core_type = #tpu.core_type<tc>, window_params = [{transform_indices = @transform_0, window_bounds = array<i64: 256, 32>}, {pipeline_mode = #tpu.pipeline_mode<synchronous>, transform_indices = @transform_1, window_bounds = array<i64: 48, 128>}, {pipeline_mode = #tpu.pipeline_mode<synchronous>, transform_indices = @transform_2, window_bounds = array<i64: 144, 128>}, {transform_indices = @transform_3, window_bounds = array<i64: 256, 128>}]} {
    %c0 = arith.constant 0 : index
    %c0_0 = arith.constant 0 : index
    %0 = vector.load %arg1[%c0, %c0_0] : memref<256x32xf32, #tpu.memory_space<vmem>>, vector<256x32xf32>
    %1 = arith.truncf %0 : vector<256x32xf32> to vector<256x32xbf16>
    %c0_1 = arith.constant 0 : index
    %c0_2 = arith.constant 0 : index
    %2 = vector.load %arg2[%c0_1, %c0_2] : memref<48x128xbf16, #tpu.memory_space<vmem>>, vector<32x128xbf16>
    %c32 = arith.constant 32 : index
    %c0_3 = arith.constant 0 : index
    %3 = vector.load %arg2[%c32, %c0_3] : memref<48x128xbf16, #tpu.memory_space<vmem>>, vector<1x128xbf16>
    %4 = arith.extf %3 : vector<1x128xbf16> to vector<1x128xf32>
    %cst = arith.constant dense<0.000000e+00> : vector<256x128xf32>
    %5 = tpu.matmul %1, %2, %cst {dimension_numbers = #tpu.dot_dimension_numbers<[1], [0], [0], [1], [0, 0, 1, 1], [], []>} : vector<256x32xbf16>, vector<32x128xbf16>, vector<256x128xf32> -> vector<256x128xf32>
    %6 = vector.broadcast %4 : vector<1x128xf32> to vector<256x128xf32>
    %7 = arith.addf %5, %6 : vector<256x128xf32>
    %8 = math.tanh %7 : vector<256x128xf32>
    %c0_4 = arith.constant 0 : index
    %c0_5 = arith.constant 0 : index
    %9 = vector.load %arg3[%c0_4, %c0_5] : memref<144x128xbf16, #tpu.memory_space<vmem>>, vector<128x128xbf16>
    %c128 = arith.constant 128 : index
    %c0_6 = arith.constant 0 : index
    %10 = vector.load %arg3[%c128, %c0_6] : memref<144x128xbf16, #tpu.memory_space<vmem>>, vector<1x128xbf16>
    %11 = arith.extf %10 : vector<1x128xbf16> to vector<1x128xf32>
    %12 = arith.truncf %8 : vector<256x128xf32> to vector<256x128xbf16>
    %cst_7 = arith.constant dense<0.000000e+00> : vector<256x128xf32>
    %13 = tpu.matmul %12, %9, %cst_7 {dimension_numbers = #tpu.dot_dimension_numbers<[1], [0], [0], [1], [0, 0, 1, 1], [], []>} : vector<256x128xbf16>, vector<128x128xbf16>, vector<256x128xf32> -> vector<256x128xf32>
    %14 = vector.broadcast %11 : vector<1x128xf32> to vector<256x128xf32>
    %15 = arith.addf %13, %14 : vector<256x128xf32>
    %16 = tpu.iota {dimensions = array<i32: 1>} : vector<256x128xi32>
    %c8_i32 = arith.constant 8 : i32
    %17 = vector.broadcast %c8_i32 : i32 to vector<256x128xi32>
    %18 = arith.cmpi slt, %16, %17 : vector<256x128xi32>
    %cst_8 = arith.constant -1.000000e+30 : f32
    %19 = vector.broadcast %cst_8 : f32 to vector<256x128xf32>
    %20 = arith.select %18, %15, %19 : vector<256x128xi1>, vector<256x128xf32>
    %cst_9 = arith.constant dense<0xFF800000> : vector<256xf32>
    %21 = vector.multi_reduction <maximumf>, %20, %cst_9 [1] : vector<256x128xf32> to vector<256xf32>
    %22 = vector.shape_cast %21 : vector<256xf32> to vector<256x1xf32>
    %23 = vector.broadcast %22 : vector<256x1xf32> to vector<256x128xf32>
    %24 = arith.subf %20, %23 : vector<256x128xf32>
    %25 = math.exp %24 : vector<256x128xf32>
    %cst_10 = arith.constant dense<0.000000e+00> : vector<256xf32>
    %26 = vector.multi_reduction <add>, %25, %cst_10 [1] : vector<256x128xf32> to vector<256xf32>
    %27 = vector.shape_cast %26 : vector<256xf32> to vector<256x1xf32>
    %28 = vector.broadcast %27 : vector<256x1xf32> to vector<256x128xf32>
    %29 = arith.divf %25, %28 : vector<256x128xf32>
    %c8_i32_11 = arith.constant 8 : i32
    %30 = vector.broadcast %c8_i32_11 : i32 to vector<256x128xi32>
    %31 = arith.cmpi eq, %16, %30 : vector<256x128xi32>
    %32 = arith.select %31, %15, %29 : vector<256x128xi1>, vector<256x128xf32>
    %33 = arith.truncf %32 : vector<256x128xf32> to vector<256x128xbf16>
    %c0_12 = arith.constant 0 : index
    %c0_13 = arith.constant 0 : index
    %34 = vector.load %arg4[%c0_12, %c0_13] : memref<256x128xbf16, #tpu.memory_space<vmem>>, vector<256x128xbf16>
    tpu.vector_store %arg4[%c0_12, %c0_13], %33 {strides = array<i32>} : memref<256x128xbf16, #tpu.memory_space<vmem>>, vector<256x128xbf16>,
    return
  }
  func.func @transform_0(%arg0: i32) -> (i32, i32) {
    %c0_i32 = arith.constant 0 : i32
    %c0_i32_0 = arith.constant 0 : i32
    return %arg0, %c0_i32 : i32, i32
  }
  func.func @transform_1(%arg0: i32) -> (i32, i32) {
    %c0_i32 = arith.constant 0 : i32
    %c0_i32_0 = arith.constant 0 : i32
    %c0_i32_1 = arith.constant 0 : i32
    return %c0_i32, %c0_i32_0 : i32, i32
  }
  func.func @transform_2(%arg0: i32) -> (i32, i32) {
    %c0_i32 = arith.constant 0 : i32
    %c0_i32_0 = arith.constant 0 : i32
    %c0_i32_1 = arith.constant 0 : i32
    return %c0_i32, %c0_i32_0 : i32, i32
  }
  func.func @transform_3(%arg0: i32) -> (i32, i32) {
    %c0_i32 = arith.constant 0 : i32
    %c0_i32_0 = arith.constant 0 : i32
    return %arg0, %c0_i32 : i32, i32
  }
}

</mosaic_0001>

<llo_original>
// kernel: agent_forward.1
$region0: #{agent_forward.1}
  #allocation0 [shape = 'u32[]', space=smem, size = 0x4, offset = 0x4, fixed_abs, tag = 'smem constant byte address 0x4 - core index']
  #allocation1 [shape = 'u32[144,128]{1,0:T(1,128)}', space=vmem, size = 0x12000, scoped, tag = 'internal scratch']
  %s0 = inlined_call_operand.vmem [shape: f32[256,32], index: 0, kind: input, shape index: {}]
  %s1 = inlined_call_operand.vmem [shape: bf16[48,128], index: 1, kind: input, shape index: {}]
  %s2 = inlined_call_operand.vmem [shape: bf16[144,128], index: 2, kind: input, shape index: {}]
  %s3 = inlined_call_operand.vmem [shape: bf16[256,128], index: 3, kind: output, shape index: {}]
  %s4 = sld [smem:[#allocation0]]
  $region22: #{agent_forward.1} parent=0
    _
  %s6 = ssub.s32 1, %s4
  %s7 = scalar_select 0, %s6, %s4
  // Predicated region
  $region2: #{agent_forward.1} parent=0 // pred_check
    _
  $region3: #{agent_forward.1} parent=0 // pred_check_branch
    %9 = sbr.rel (0) target = $region5
  $region4: #{agent_forward.1} parent=0 // pred_region
    _
  $region5: #{agent_forward.1} parent=0 // pred_fallthru
    _
  // Predicated region
  $region6: #{agent_forward.1} parent=0 // pred_check
    _
  $region7: #{agent_forward.1} parent=0 // pred_check_branch
    %11 = sbr.rel (0) target = $region9
  $region8: #{agent_forward.1} parent=0 // pred_region
    _
  $region9: #{agent_forward.1} parent=0 // pred_fallthru
    _
  // Predicated region
  $region10: #{agent_forward.1} parent=0 // pred_check
    _
  $region11: #{agent_forward.1} parent=0 // pred_check_branch
    %13 = sbr.rel (0) target = $region13
  $region12: #{agent_forward.1} parent=0 // pred_region
    _
  $region13: #{agent_forward.1} parent=0 // pred_fallthru
    _
  %v15 = vld [vmem:[%s0] sm:$0xff]
  %v16 = vld [vmem:[%s0 + $0x8] sm:$0xff]
  %v17 = vld [vmem:[%s0 + $0x10] sm:$0xff]
  %v18 = vld [vmem:[%s0 + $0x18] sm:$0xff]
  %v19 = vld [vmem:[%s0 + $0x20] sm:$0xff]
  %v20 = vld [vmem:[%s0 + $0x28] sm:$0xff]
  %v21 = vld [vmem:[%s0 + $0x30] sm:$0xff]
  %v22 = vld [vmem:[%s0 + $0x38] sm:$0xff]
  %v23 = vld [vmem:[%s0 + $0x40] sm:$0xff]
  %v24 = vld [vmem:[%s0 + $0x48] sm:$0xff]
  %v25 = vld [vmem:[%s0 + $0x50] sm:$0xff]
  %v26 = vld [vmem:[%s0 + $0x58] sm:$0xff]
  %v27 = vld [vmem:[%s0 + $0x60] sm:$0xff]
  %v28 = vld [vmem:[%s0 + $0x68] sm:$0xff]
  %v29 = vld [vmem:[%s0 + $0x70] sm:$0xff]
  %v30 = vld [vmem:[%s0 + $0x78] sm:$0xff]
  %v31 = vld [vmem:[%s0 + $0x80] sm:$0xff]
  %v32 = vld [vmem:[%s0 + $0x88] sm:$0xff]
  %v33 = vld [vmem:[%s0 + $0x90] sm:$0xff]
  %v34 = vld [vmem:[%s0 + $0x98] sm:$0xff]
  %v35 = vld [vmem:[%s0 + $0xa0] sm:$0xff]
  %v36 = vld [vmem:[%s0 + $0xa8] sm:$0xff]
  %v37 = vld [vmem:[%s0 + $0xb0] sm:$0xff]
  %v38 = vld [vmem:[%s0 + $0xb8] sm:$0xff]
  %v39 = vld [vmem:[%s0 + $0xc0] sm:$0xff]
  %v40 = vld [vmem:[%s0 + $0xc8] sm:$0xff]
  %v41 = vld [vmem:[%s0 + $0xd0] sm:$0xff]
  %v42 = vld [vmem:[%s0 + $0xd8] sm:$0xff]
  %v43 = vld [vmem:[%s0 + $0xe0] sm:$0xff]
  %v44 = vld [vmem:[%s0 + $0xe8] sm:$0xff]
  %v45 = vld [vmem:[%s0 + $0xf0] sm:$0xff]
  %v46 = vld [vmem:[%s0 + $0xf8] sm:$0xff]
  %v47 = vpack.c.bf16 %v16, %v15
  %v48 = vpack.c.bf16 %v18, %v17
  %v49 = vpack.c.bf16 %v20, %v19
  %v50 = vpack.c.bf16 %v22, %v21
  %v51 = vpack.c.bf16 %v24, %v23
  %v52 = vpack.c.bf16 %v26, %v25
  %v53 = vpack.c.bf16 %v28, %v27
  %v54 = vpack.c.bf16 %v30, %v29
  %v55 = vpack.c.bf16 %v32, %v31
  %v56 = vpack.c.bf16 %v34, %v33
  %v57 = vpack.c.bf16 %v36, %v35
  %v58 = vpack.c.bf16 %v38, %v37
  %v59 = vpack.c.bf16 %v40, %v39
  %v60 = vpack.c.bf16 %v42, %v41
  %v61 = vpack.c.bf16 %v44, %v43
  %v62 = vpack.c.bf16 %v46, %v45
  %v63 = vld [vmem:[%s1] sm:$0xf]
  %v64 = vld [vmem:[%s1 + $0x4] sm:$0xf]
  %v65 = vld [vmem:[%s1 + $0x8] sm:$0xf]
  %v66 = vld [vmem:[%s1 + $0xc] sm:$0xf]
  %v67 = vld [vmem:[%s1 + $0x10] sm:$0x1]
  %v68 = vunpack.c.l.bf16 %v67
  %v69 = vlaneseq
  %v70 = vshrl.u32 %v69, 7
  %v71 = vsub.s32 0, %v70
  %v72 = vrot.slane %v68, %v71
  %v77 = vunpack.c.l.b16 %v63
  %v78 = vunpack.c.l.b16 %v64
  %v79 = vunpack.c.l.b16 %v65
  %v80 = vunpack.c.l.b16 %v66
  %v81 = vpack.c.b16 %v78, %v77
  %v82 = vpack.c.b16 %v80, %v79
  %vm85 = vcmask 261120
  %v87 = vsel %vm85, %v47, 0
  %v90 = vsel %vm85, %v48, 0
  %v93 = vsel %vm85, %v49, 0
  %v96 = vsel %vm85, %v50, 0
  %v99 = vsel %vm85, %v51, 0
  %v102 = vsel %vm85, %v52, 0
  %v105 = vsel %vm85, %v53, 0
  %v108 = vsel %vm85, %v54, 0
  %v111 = vsel %vm85, %v55, 0
  %v114 = vsel %vm85, %v56, 0
  %v117 = vsel %vm85, %v57, 0
  %v120 = vsel %vm85, %v58, 0
  %v123 = vsel %vm85, %v59, 0
  %v126 = vsel %vm85, %v60, 0
  %v129 = vsel %vm85, %v61, 0
  %v132 = vsel %vm85, %v62, 0
  %134 = vmatprep.subr.bf16.mxu0 0
  %135 = vmatpush1.bf16.msra.mxu0 %v81
  %136 = vmatprep.subr.bf16.mxu0 0
  %137 = vmatpush1.bf16.msra.mxu0 %v82
  %138 = vmatprep.subr.bf16.mxu0 0
  %139 = vmatpush1.bf16.msra.mxu0 0
  %140 = vmatprep.subr.bf16.mxu0 0
  %141 = vmatpush1.bf16.msra.mxu0 0
  %142 = vmatprep.subr.bf16.mxu0 0
  %143 = vmatpush1.bf16.msra.mxu0 0
  %144 = vmatprep.subr.bf16.mxu0 0
  %145 = vmatpush1.bf16.msra.mxu0 0
  %146 = vmatprep.subr.bf16.mxu0 0
  %147 = vmatpush1.bf16.msra.mxu0 0
  %148 = vmatprep.subr.bf16.mxu0 0
  %149 = vmatpush1.bf16.msra.mxu0 0
  %150 = vmatprep.subr.bf16.mxu0 0
  %151 = vmatpush1.bf16.msra.mxu0 0
  %152 = vmatprep.subr.bf16.mxu0 0
  %153 = vmatpush1.bf16.msra.mxu0 0
  %154 = vmatprep.subr.bf16.mxu0 0
  %155 = vmatpush1.bf16.msra.mxu0 0
  %156 = vmatprep.subr.bf16.mxu0 0
  %157 = vmatpush1.bf16.msra.mxu0 0
  %158 = vmatprep.subr.bf16.mxu0 0
  %159 = vmatpush1.bf16.msra.mxu0 0
  %160 = vmatprep.subr.bf16.mxu0 0
  %161 = vmatpush1.bf16.msra.mxu0 0
  %162 = vmatprep.subr.bf16.mxu0 0
  %163 = vmatpush1.bf16.msra.mxu0 0
  %164 = vmatprep.subr.bf16.mxu0 0
  %165 = vmatpush1.bf16.msra.mxu0 0
  %166 = vmatprep.mubr.bf16.mxu0 0
  %167 = vmatmul.mubr.bf16.gmra.mrb[0].mxu0 %v87
  %v168 = vpop.f32.mrb[0].mxu0
  %v169 = vadd.f32 %v72, %v168
  %v170 = vpop.f32.mrb[0].mxu0
  %v171 = vpop.f32.mrb[0].mxu0
  %v172 = vadd.f32 %v72, %v171
  %v173 = vpop.f32.mrb[0].mxu0
  %174 = vmatprep.mubr.bf16.mxu0 0
  %175 = vmatmul.mubr.bf16.gmra.mrb[0].mxu0 %v90
  %v176 = vpop.f32.mrb[0].mxu0
  %v177 = vadd.f32 %v72, %v176
  %v178 = vpop.f32.mrb[0].mxu0
  %v179 = vpop.f32.mrb[0].mxu0
  %v180 = vadd.f32 %v72, %v179
  %v181 = vpop.f32.mrb[0].mxu0
  %182 = vmatprep.mubr.bf16.mxu0 0
  %183 = vmatmul.mubr.bf16.gmra.mrb[0].mxu0 %v93
  %v184 = vpop.f32.mrb[0].mxu0
  %v185 = vadd.f32 %v72, %v184
  %v186 = vpop.f32.mrb[0].mxu0
  %v187 = vpop.f32.mrb[0].mxu0
  %v188 = vadd.f32 %v72, %v187
  %v189 = vpop.f32.mrb[0].mxu0
  %190 = vmatprep.mubr.bf16.mxu0 0
  %191 = vmatmul.mubr.bf16.gmra.mrb[0].mxu0 %v96
  %v192 = vpop.f32.mrb[0].mxu0
  %v193 = vadd.f32 %v72, %v192
  %v194 = vpop.f32.mrb[0].mxu0
  %v195 = vpop.f32.mrb[0].mxu0
  %v196 = vadd.f32 %v72, %v195
  %v197 = vpop.f32.mrb[0].mxu0
  %198 = vmatprep.mubr.bf16.mxu0 0
  %199 = vmatmul.mubr.bf16.gmra.mrb[0].mxu0 %v99
  %v200 = vpop.f32.mrb[0].mxu0
  %v201 = vadd.f32 %v72, %v200
  %v202 = vpop.f32.mrb[0].mxu0
  %v203 = vpop.f32.mrb[0].mxu0
  %v204 = vadd.f32 %v72, %v203
  %v205 = vpop.f32.mrb[0].mxu0
  %206 = vmatprep.mubr.bf16.mxu0 0
  %207 = vmatmul.mubr.bf16.gmra.mrb[0].mxu0 %v102
  %v208 = vpop.f32.mrb[0].mxu0
  %v209 = vadd.f32 %v72, %v208
  %v210 = vpop.f32.mrb[0].mxu0
  %v211 = vpop.f32.mrb[0].mxu0
  %v212 = vadd.f32 %v72, %v211
  %v213 = vpop.f32.mrb[0].mxu0
  %214 = vmatprep.mubr.bf16.mxu0 0
  %215 = vmatmul.mubr.bf16.gmra.mrb[0].mxu0 %v105
  %v216 = vpop.f32.mrb[0].mxu0
  %v217 = vadd.f32 %v72, %v216
  %v218 = vpop.f32.mrb[0].mxu0
  %v219 = vpop.f32.mrb[0].mxu0
  %v220 = vadd.f32 %v72, %v219
  %v221 = vpop.f32.mrb[0].mxu0
  %222 = vmatprep.mubr.bf16.mxu0 0
  %223 = vmatmul.mubr.bf16.gmra.mrb[0].mxu0 %v108
  %v224 = vpop.f32.mrb[0].mxu0
  %v225 = vadd.f32 %v72, %v224
  %v226 = vpop.f32.mrb[0].mxu0
  %v227 = vpop.f32.mrb[0].mxu0
  %v228 = vadd.f32 %v72, %v227
  %v229 = vpop.f32.mrb[0].mxu0
  %230 = vmatprep.mubr.bf16.mxu0 0
  %231 = vmatmul.mubr.bf16.gmra.mrb[0].mxu0 %v111
  %v232 = vpop.f32.mrb[0].mxu0
  %v233 = vadd.f32 %v72, %v232
  %v234 = vpop.f32.mrb[0].mxu0
  %v235 = vpop.f32.mrb[0].mxu0
  %v236 = vadd.f32 %v72, %v235
  %v237 = vpop.f32.mrb[0].mxu0
  %238 = vmatprep.mubr.bf16.mxu0 0
  %239 = vmatmul.mubr.bf16.gmra.mrb[0].mxu0 %v114
  %v240 = vpop.f32.mrb[0].mxu0
  %v241 = vadd.f32 %v72, %v240
  %v242 = vpop.f32.mrb[0].mxu0
  %v243 = vpop.f32.mrb[0].mxu0
  %v244 = vadd.f32 %v72, %v243
  %v245 = vpop.f32.mrb[0].mxu0
  %246 = vmatprep.mubr.bf16.mxu0 0
  %247 = vmatmul.mubr.bf16.gmra.mrb[0].mxu0 %v117
  %v248 = vpop.f32.mrb[0].mxu0
  %v249 = vadd.f32 %v72, %v248
  %v250 = vpop.f32.mrb[0].mxu0
  %v251 = vpop.f32.mrb[0].mxu0
  %v252 = vadd.f32 %v72, %v251
  %v253 = vpop.f32.mrb[0].mxu0
  %254 = vmatprep.mubr.bf16.mxu0 0
  %255 = vmatmul.mubr.bf16.gmra.mrb[0].mxu0 %v120
  %v256 = vpop.f32.mrb[0].mxu0
  %v257 = vadd.f32 %v72, %v256
  %v258 = vpop.f32.mrb[0].mxu0
  %v259 = vpop.f32.mrb[0].mxu0
  %v260 = vadd.f32 %v72, %v259
  %v261 = vpop.f32.mrb[0].mxu0
  %262 = vmatprep.mubr.bf16.mxu0 0
  %263 = vmatmul.mubr.bf16.gmra.mrb[0].mxu0 %v123
  %v264 = vpop.f32.mrb[0].mxu0
  %v265 = vadd.f32 %v72, %v264
  %v266 = vpop.f32.mrb[0].mxu0
  %v267 = vpop.f32.mrb[0].mxu0
  %v268 = vadd.f32 %v72, %v267
  %v269 = vpop.f32.mrb[0].mxu0
  %270 = vmatprep.mubr.bf16.mxu0 0
  %271 = vmatmul.mubr.bf16.gmra.mrb[0].mxu0 %v126
  %v272 = vpop.f32.mrb[0].mxu0
  %v273 = vadd.f32 %v72, %v272
  %v274 = vpop.f32.mrb[0].mxu0
  %v275 = vpop.f32.mrb[0].mxu0
  %v276 = vadd.f32 %v72, %v275
  %v277 = vpop.f32.mrb[0].mxu0
  %278 = vmatprep.mubr.bf16.mxu0 0
  %279 = vmatmul.mubr.bf16.gmra.mrb[0].mxu0 %v129
  %v280 = vpop.f32.mrb[0].mxu0
  %v281 = vadd.f32 %v72, %v280
  %v282 = vpop.f32.mrb[0].mxu0
  %v283 = vpop.f32.mrb[0].mxu0
  %v284 = vadd.f32 %v72, %v283
  %v285 = vpop.f32.mrb[0].mxu0
  %286 = vmatprep.mubr.bf16.mxu0 0
  %287 = vmatmul.mubr.bf16.gmra.mrb[0].mxu0 %v132
  %v288 = vpop.f32.mrb[0].mxu0
  %v289 = vadd.f32 %v72, %v288
  %v290 = vpop.f32.mrb[0].mxu0
  %v291 = vpop.f32.mrb[0].mxu0
  %v292 = vadd.f32 %v72, %v291
  %v293 = vpop.f32.mrb[0].mxu0
  %294 = vdwg.mxu0
  %v295 = vtanh.pop %v169
  %v296 = vtanh.pop %v172
  %v297 = vtanh.pop %v177
  %v298 = vtanh.pop %v180
  %v299 = vtanh.pop %v185
  %v300 = vtanh.pop %v188
  %v301 = vtanh.pop %v193
  %v302 = vtanh.pop %v196
  %v303 = vtanh.pop %v201
  %v304 = vtanh.pop %v204
  %v305 = vtanh.pop %v209
  %v306 = vtanh.pop %v212
  %v307 = vtanh.pop %v217
  %v308 = vtanh.pop %v220
  %v309 = vtanh.pop %v225
  %v310 = vtanh.pop %v228
  %v311 = vtanh.pop %v233
  %v312 = vtanh.pop %v236
  %v313 = vtanh.pop %v241
  %v314 = vtanh.pop %v244
  %v315 = vtanh.pop %v249
  %v316 = vtanh.pop %v252
  %v317 = vtanh.pop %v257
  %v318 = vtanh.pop %v260
  %v319 = vtanh.pop %v265
  %v320 = vtanh.pop %v268
  %v321 = vtanh.pop %v273
  %v322 = vtanh.pop %v276
  %v323 = vtanh.pop %v281
  %v324 = vtanh.pop %v284
  %v325 = vtanh.pop %v289
  %v326 = vtanh.pop %v292
  %v327 = vld [vmem:[%s2] sm:$0xf]
  %v328 = vld [vmem:[%s2 + $0x4] sm:$0xf]
  %v329 = vld [vmem:[%s2 + $0x8] sm:$0xf]
  %v330 = vld [vmem:[%s2 + $0xc] sm:$0xf]
  %v331 = vld [vmem:[%s2 + $0x10] sm:$0xf]
  %v332 = vld [vmem:[%s2 + $0x14] sm:$0xf]
  %v333 = vld [vmem:[%s2 + $0x18] sm:$0xf]
  %v334 = vld [vmem:[%s2 + $0x1c] sm:$0xf]
  %v335 = vld [vmem:[%s2 + $0x20] sm:$0xf]
  %v336 = vld [vmem:[%s2 + $0x24] sm:$0xf]
  %v337 = vld [vmem:[%s2 + $0x28] sm:$0xf]
  %v338 = vld [vmem:[%s2 + $0x2c] sm:$0xf]
  %v339 = vld [vmem:[%s2 + $0x30] sm:$0xf]
  %v340 = vld [vmem:[%s2 + $0x34] sm:$0xf]
  %v341 = vld [vmem:[%s2 + $0x38] sm:$0xf]
  %v342 = vld [vmem:[%s2 + $0x3c] sm:$0xf]
  %v343 = vld [vmem:[%s2 + $0x40] sm:$0x1]
  %v344 = vunpack.c.l.bf16 %v343
  %v345 = vpack.c.bf16 %v296, %v295
  %v346 = vpack.c.bf16 %v298, %v297
  %v347 = vpack.c.bf16 %v300, %v299
  %v348 = vpack.c.bf16 %v302, %v301
  %v349 = vpack.c.bf16 %v304, %v303
  %v350 = vpack.c.bf16 %v306, %v305
  %v351 = vpack.c.bf16 %v308, %v307
  %v352 = vpack.c.bf16 %v310, %v309
  %v353 = vpack.c.bf16 %v312, %v311
  %v354 = vpack.c.bf16 %v314, %v313
  %v355 = vpack.c.bf16 %v316, %v315
  %v356 = vpack.c.bf16 %v318, %v317
  %v357 = vpack.c.bf16 %v320, %v319
  %v358 = vpack.c.bf16 %v322, %v321
  %v359 = vpack.c.bf16 %v324, %v323
  %v360 = vpack.c.bf16 %v326, %v325
  %v361 = vlaneseq
  %v362 = vshrl.u32 %v361, 7
  %v363 = vsub.s32 0, %v362
  %v364 = vrot.slane %v344, %v363
  %v381 = vunpack.c.l.b16 %v327
  %v382 = vunpack.c.l.b16 %v328
  %v383 = vunpack.c.l.b16 %v329
  %v384 = vunpack.c.l.b16 %v330
  %v385 = vunpack.c.l.b16 %v331
  %v386 = vunpack.c.l.b16 %v332
  %v387 = vunpack.c.l.b16 %v333
  %v388 = vunpack.c.l.b16 %v334
  %v389 = vunpack.c.l.b16 %v335
  %v390 = vunpack.c.l.b16 %v336
  %v391 = vunpack.c.l.b16 %v337
  %v392 = vunpack.c.l.b16 %v338
  %v393 = vunpack.c.l.b16 %v339
  %v394 = vunpack.c.l.b16 %v340
  %v395 = vunpack.c.l.b16 %v341
  %v396 = vunpack.c.l.b16 %v342
  %v397 = vpack.c.b16 %v382, %v381
  %v398 = vpack.c.b16 %v384, %v383
  %v399 = vpack.c.b16 %v386, %v385
  %v400 = vpack.c.b16 %v388, %v387
  %v401 = vpack.c.b16 %v390, %v389
  %v402 = vpack.c.b16 %v392, %v391
  %v403 = vpack.c.b16 %v394, %v393
  %v404 = vpack.c.b16 %v396, %v395
  %413 = vmatprep.subr.bf16.mxu0 0
  %414 = vmatpush1.bf16.msra.mxu0 %v397
  %415 = vmatprep.subr.bf16.mxu0 0
  %416 = vmatpush1.bf16.msra.mxu0 %v398
  %417 = vmatprep.subr.bf16.mxu0 0
  %418 = vmatpush1.bf16.msra.mxu0 %v399
  %419 = vmatprep.subr.bf16.mxu0 0
  %420 = vmatpush1.bf16.msra.mxu0 %v400
  %421 = vmatprep.subr.bf16.mxu0 0
  %422 = vmatpush1.bf16.msra.mxu0 %v401
  %423 = vmatprep.subr.bf16.mxu0 0
  %424 = vmatpush1.bf16.msra.mxu0 %v402
  %425 = vmatprep.subr.bf16.mxu0 0
  %426 = vmatpush1.bf16.msra.mxu0 %v403
  %427 = vmatprep.subr.bf16.mxu0 0
  %428 = vmatpush1.bf16.msra.mxu0 %v404
  %429 = vmatprep.subr.bf16.mxu0 0
  %430 = vmatpush1.bf16.msra.mxu0 0
  %431 = vmatprep.subr.bf16.mxu0 0
  %432 = vmatpush1.bf16.msra.mxu0 0
  %433 = vmatprep.subr.bf16.mxu0 0
  %434 = vmatpush1.bf16.msra.mxu0 0
  %435 = vmatprep.subr.bf16.mxu0 0
  %436 = vmatpush1.bf16.msra.mxu0 0
  %437 = vmatprep.subr.bf16.mxu0 0
  %438 = vmatpush1.bf16.msra.mxu0 0
  %439 = vmatprep.subr.bf16.mxu0 0
  %440 = vmatpush1.bf16.msra.mxu0 0
  %441 = vmatprep.subr.bf16.mxu0 0
  %442 = vmatpush1.bf16.msra.mxu0 0
  %443 = vmatprep.subr.bf16.mxu0 0
  %444 = vmatpush1.bf16.msra.mxu0 0
  %445 = vmatprep.mubr.bf16.mxu0 0
  %446 = vmatmul.mubr.bf16.gmra.mrb[0].mxu0 %v345
  %v447 = vpop.f32.mrb[0].mxu0
  %v448 = vadd.f32 %v364, %v447
  %v449 = vpop.f32.mrb[0].mxu0
  %v450 = vpop.f32.mrb[0].mxu0
  %v451 = vadd.f32 %v364, %v450
  %v452 = vpop.f32.mrb[0].mxu0
  %453 = vmatprep.mubr.bf16.mxu0 0
  %454 = vmatmul.mubr.bf16.gmra.mrb[0].mxu0 %v346
  %v455 = vpop.f32.mrb[0].mxu0
  %v456 = vadd.f32 %v364, %v455
  %v457 = vpop.f32.mrb[0].mxu0
  %v458 = vpop.f32.mrb[0].mxu0
  %v459 = vadd.f32 %v364, %v458
  %v460 = vpop.f32.mrb[0].mxu0
  %461 = vmatprep.mubr.bf16.mxu0 0
  %462 = vmatmul.mubr.bf16.gmra.mrb[0].mxu0 %v347
  %v463 = vpop.f32.mrb[0].mxu0
  %v464 = vadd.f32 %v364, %v463
  %v465 = vpop.f32.mrb[0].mxu0
  %v466 = vpop.f32.mrb[0].mxu0
  %v467 = vadd.f32 %v364, %v466
  %v468 = vpop.f32.mrb[0].mxu0
  %469 = vmatprep.mubr.bf16.mxu0 0
  %470 = vmatmul.mubr.bf16.gmra.mrb[0].mxu0 %v348
  %v471 = vpop.f32.mrb[0].mxu0
  %v472 = vadd.f32 %v364, %v471
  %v473 = vpop.f32.mrb[0].mxu0
  %v474 = vpop.f32.mrb[0].mxu0
  %v475 = vadd.f32 %v364, %v474
  %v476 = vpop.f32.mrb[0].mxu0
  %477 = vmatprep.mubr.bf16.mxu0 0
  %478 = vmatmul.mubr.bf16.gmra.mrb[0].mxu0 %v349
  %v479 = vpop.f32.mrb[0].mxu0
  %v480 = vadd.f32 %v364, %v479
  %v481 = vpop.f32.mrb[0].mxu0
  %v482 = vpop.f32.mrb[0].mxu0
  %v483 = vadd.f32 %v364, %v482
  %v484 = vpop.f32.mrb[0].mxu0
  %485 = vmatprep.mubr.bf16.mxu0 0
  %486 = vmatmul.mubr.bf16.gmra.mrb[0].mxu0 %v350
  %v487 = vpop.f32.mrb[0].mxu0
  %v488 = vadd.f32 %v364, %v487
  %v489 = vpop.f32.mrb[0].mxu0
  %v490 = vpop.f32.mrb[0].mxu0
  %v491 = vadd.f32 %v364, %v490
  %v492 = vpop.f32.mrb[0].mxu0
  %493 = vmatprep.mubr.bf16.mxu0 0
  %494 = vmatmul.mubr.bf16.gmra.mrb[0].mxu0 %v351
  %v495 = vpop.f32.mrb[0].mxu0
  %v496 = vadd.f32 %v364, %v495
  %v497 = vpop.f32.mrb[0].mxu0
  %v498 = vpop.f32.mrb[0].mxu0
  %v499 = vadd.f32 %v364, %v498
  %v500 = vpop.f32.mrb[0].mxu0
  %501 = vmatprep.mubr.bf16.mxu0 0
  %502 = vmatmul.mubr.bf16.gmra.mrb[0].mxu0 %v352
  %v503 = vpop.f32.mrb[0].mxu0
  %v504 = vadd.f32 %v364, %v503
  %v505 = vpop.f32.mrb[0].mxu0
  %v506 = vpop.f32.mrb[0].mxu0
  %v507 = vadd.f32 %v364, %v506
  %v508 = vpop.f32.mrb[0].mxu0
  %509 = vmatprep.mubr.bf16.mxu0 0
  %510 = vmatmul.mubr.bf16.gmra.mrb[0].mxu0 %v353
  %v511 = vpop.f32.mrb[0].mxu0
  %v512 = vadd.f32 %v364, %v511
  %v513 = vpop.f32.mrb[0].mxu0
  %v514 = vpop.f32.mrb[0].mxu0
  %v515 = vadd.f32 %v364, %v514
  %v516 = vpop.f32.mrb[0].mxu0
  %517 = vmatprep.mubr.bf16.mxu0 0
  %518 = vmatmul.mubr.bf16.gmra.mrb[0].mxu0 %v354
  %v519 = vpop.f32.mrb[0].mxu0
  %v520 = vadd.f32 %v364, %v519
  %v521 = vpop.f32.mrb[0].mxu0
  %v522 = vpop.f32.mrb[0].mxu0
  %v523 = vadd.f32 %v364, %v522
  %v524 = vpop.f32.mrb[0].mxu0
  %525 = vmatprep.mubr.bf16.mxu0 0
  %526 = vmatmul.mubr.bf16.gmra.mrb[0].mxu0 %v355
  %v527 = vpop.f32.mrb[0].mxu0
  %v528 = vadd.f32 %v364, %v527
  %v529 = vpop.f32.mrb[0].mxu0
  %v530 = vpop.f32.mrb[0].mxu0
  %v531 = vadd.f32 %v364, %v530
  %v532 = vpop.f32.mrb[0].mxu0
  %533 = vmatprep.mubr.bf16.mxu0 0
  %534 = vmatmul.mubr.bf16.gmra.mrb[0].mxu0 %v356
  %v535 = vpop.f32.mrb[0].mxu0
  %v536 = vadd.f32 %v364, %v535
  %v537 = vpop.f32.mrb[0].mxu0
  %v538 = vpop.f32.mrb[0].mxu0
  %v539 = vadd.f32 %v364, %v538
  %v540 = vpop.f32.mrb[0].mxu0
  %541 = vmatprep.mubr.bf16.mxu0 0
  %542 = vmatmul.mubr.bf16.gmra.mrb[0].mxu0 %v357
  %v543 = vpop.f32.mrb[0].mxu0
  %v544 = vadd.f32 %v364, %v543
  %v545 = vpop.f32.mrb[0].mxu0
  %v546 = vpop.f32.mrb[0].mxu0
  %v547 = vadd.f32 %v364, %v546
  %v548 = vpop.f32.mrb[0].mxu0
  %549 = vmatprep.mubr.bf16.mxu0 0
  %550 = vmatmul.mubr.bf16.gmra.mrb[0].mxu0 %v358
  %v551 = vpop.f32.mrb[0].mxu0
  %v552 = vadd.f32 %v364, %v551
  %v553 = vpop.f32.mrb[0].mxu0
  %v554 = vpop.f32.mrb[0].mxu0
  %v555 = vadd.f32 %v364, %v554
  %v556 = vpop.f32.mrb[0].mxu0
  %557 = vmatprep.mubr.bf16.mxu0 0
  %558 = vmatmul.mubr.bf16.gmra.mrb[0].mxu0 %v359
  %v559 = vpop.f32.mrb[0].mxu0
  %v560 = vadd.f32 %v364, %v559
  %v561 = vpop.f32.mrb[0].mxu0
  %v562 = vpop.f32.mrb[0].mxu0
  %v563 = vadd.f32 %v364, %v562
  %v564 = vpop.f32.mrb[0].mxu0
  %565 = vmatprep.mubr.bf16.mxu0 0
  %566 = vmatmul.mubr.bf16.gmra.mrb[0].mxu0 %v360
  %v567 = vpop.f32.mrb[0].mxu0
  %v568 = vadd.f32 %v364, %v567
  %v569 = vpop.f32.mrb[0].mxu0
  %v570 = vpop.f32.mrb[0].mxu0
  %v571 = vadd.f32 %v364, %v570
  %v572 = vpop.f32.mrb[0].mxu0
  %573 = vdwg.mxu0
  %v574 = vlaneseq
  %v575 = vand.u32 %v574, 127
  %vm576 = vcmp.lt.s32.totalorder %v575, 8
  %v577 = vsel %vm576, %v448, -1e+30
  %v578 = vsel %vm576, %v451, -1e+30
  %v579 = vsel %vm576, %v456, -1e+30
  %v580 = vsel %vm576, %v459, -1e+30
  %v581 = vsel %vm576, %v464, -1e+30
  %v582 = vsel %vm576, %v467, -1e+30
  %v583 = vsel %vm576, %v472, -1e+30
  %v584 = vsel %vm576, %v475, -1e+30
  %v585 = vsel %vm576, %v480, -1e+30
  %v586 = vsel %vm576, %v483, -1e+30
  %v587 = vsel %vm576, %v488, -1e+30
  %v588 = vsel %vm576, %v491, -1e+30
  %v589 = vsel %vm576, %v496, -1e+30
  %v590 = vsel %vm576, %v499, -1e+30
  %v591 = vsel %vm576, %v504, -1e+30
  %v592 = vsel %vm576, %v507, -1e+30
  %v593 = vsel %vm576, %v512, -1e+30
  %v594 = vsel %vm576, %v515, -1e+30
  %v595 = vsel %vm576, %v520, -1e+30
  %v596 = vsel %vm576, %v523, -1e+30
  %v597 = vsel %vm576, %v528, -1e+30
  %v598 = vsel %vm576, %v531, -1e+30
  %v599 = vsel %vm576, %v536, -1e+30
  %v600 = vsel %vm576, %v539, -1e+30
  %v601 = vsel %vm576, %v544, -1e+30
  %v602 = vsel %vm576, %v547, -1e+30
  %v603 = vsel %vm576, %v552, -1e+30
  %v604 = vsel %vm576, %v555, -1e+30
  %v605 = vsel %vm576, %v560, -1e+30
  %v606 = vsel %vm576, %v563, -1e+30
  %v607 = vsel %vm576, %v568, -1e+30
  %v608 = vsel %vm576, %v571, -1e+30
  %609 = vmax.xlane.f32.xlu0 %v577
  %v610 = vpop.xlane.xlu0 %609
  %611 = vmax.xlane.f32.xlu0 %v578
  %v612 = vpop.xlane.xlu0 %611
  %613 = vmax.xlane.f32.xlu0 %v579
  %v614 = vpop.xlane.xlu0 %613
  %615 = vmax.xlane.f32.xlu0 %v580
  %v616 = vpop.xlane.xlu0 %615
  %617 = vmax.xlane.f32.xlu0 %v581
  %v618 = vpop.xlane.xlu0 %617
  %619 = vmax.xlane.f32.xlu0 %v582
  %v620 = vpop.xlane.xlu0 %619
  %621 = vmax.xlane.f32.xlu0 %v583
  %v622 = vpop.xlane.xlu0 %621
  %623 = vmax.xlane.f32.xlu0 %v584
  %v624 = vpop.xlane.xlu0 %623
  %625 = vmax.xlane.f32.xlu0 %v585
  %v626 = vpop.xlane.xlu0 %625
  %627 = vmax.xlane.f32.xlu0 %v586
  %v628 = vpop.xlane.xlu0 %627
  %629 = vmax.xlane.f32.xlu0 %v587
  %v630 = vpop.xlane.xlu0 %629
  %631 = vmax.xlane.f32.xlu0 %v588
  %v632 = vpop.xlane.xlu0 %631
  %633 = vmax.xlane.f32.xlu0 %v589
  %v634 = vpop.xlane.xlu0 %633
  %635 = vmax.xlane.f32.xlu0 %v590
  %v636 = vpop.xlane.xlu0 %635
  %637 = vmax.xlane.f32.xlu0 %v591
  %v638 = vpop.xlane.xlu0 %637
  %639 = vmax.xlane.f32.xlu0 %v592
  %v640 = vpop.xlane.xlu0 %639
  %641 = vmax.xlane.f32.xlu0 %v593
  %v642 = vpop.xlane.xlu0 %641
  %643 = vmax.xlane.f32.xlu0 %v594
  %v644 = vpop.xlane.xlu0 %643
  %645 = vmax.xlane.f32.xlu0 %v595
  %v646 = vpop.xlane.xlu0 %645
  %647 = vmax.xlane.f32.xlu0 %v596
  %v648 = vpop.xlane.xlu0 %647
  %649 = vmax.xlane.f32.xlu0 %v597
  %v650 = vpop.xlane.xlu0 %649
  %651 = vmax.xlane.f32.xlu0 %v598
  %v652 = vpop.xlane.xlu0 %651
  %653 = vmax.xlane.f32.xlu0 %v599
  %v654 = vpop.xlane.xlu0 %653
  %655 = vmax.xlane.f32.xlu0 %v600
  %v656 = vpop.xlane.xlu0 %655
  %657 = vmax.xlane.f32.xlu0 %v601
  %v658 = vpop.xlane.xlu0 %657
  %659 = vmax.xlane.f32.xlu0 %v602
  %v660 = vpop.xlane.xlu0 %659
  %661 = vmax.xlane.f32.xlu0 %v603
  %v662 = vpop.xlane.xlu0 %661
  %663 = vmax.xlane.f32.xlu0 %v604
  %v664 = vpop.xlane.xlu0 %663
  %665 = vmax.xlane.f32.xlu0 %v605
  %v666 = vpop.xlane.xlu0 %665
  %667 = vmax.xlane.f32.xlu0 %v606
  %v668 = vpop.xlane.xlu0 %667
  %669 = vmax.xlane.f32.xlu0 %v607
  %v670 = vpop.xlane.xlu0 %669
  %671 = vmax.xlane.f32.xlu0 %v608
  %v672 = vpop.xlane.xlu0 %671
  %v673 = vsub.f32 %v577, %v610
  %v674 = vsub.f32 %v578, %v612
  %v675 = vsub.f32 %v579, %v614
  %v676 = vsub.f32 %v580, %v616
  %v677 = vsub.f32 %v581, %v618
  %v678 = vsub.f32 %v582, %v620
  %v679 = vsub.f32 %v583, %v622
  %v680 = vsub.f32 %v584, %v624
  %v681 = vsub.f32 %v585, %v626
  %v682 = vsub.f32 %v586, %v628
  %v683 = vsub.f32 %v587, %v630
  %v684 = vsub.f32 %v588, %v632
  %v685 = vsub.f32 %v589, %v634
  %v686 = vsub.f32 %v590, %v636
  %v687 = vsub.f32 %v591, %v638
  %v688 = vsub.f32 %v592, %v640
  %v689 = vsub.f32 %v593, %v642
  %v690 = vsub.f32 %v594, %v644
  %v691 = vsub.f32 %v595, %v646
  %v692 = vsub.f32 %v596, %v648
  %v693 = vsub.f32 %v597, %v650
  %v694 = vsub.f32 %v598, %v652
  %v695 = vsub.f32 %v599, %v654
  %v696 = vsub.f32 %v600, %v656
  %v697 = vsub.f32 %v601, %v658
  %v698 = vsub.f32 %v602, %v660
  %v699 = vsub.f32 %v603, %v662
  %v700 = vsub.f32 %v604, %v664
  %v701 = vsub.f32 %v605, %v666
  %v702 = vsub.f32 %v606, %v668
  %v703 = vsub.f32 %v607, %v670
  %v704 = vsub.f32 %v608, %v672
  %v705 = vmul.f32 %v673, 1.442695
  %v706 = vpow.pop %v705
  %v707 = vmul.f32 %v674, 1.442695
  %v708 = vpow.pop %v707
  %v709 = vmul.f32 %v675, 1.442695
  %v710 = vpow.pop %v709
  %v711 = vmul.f32 %v676, 1.442695
  %v712 = vpow.pop %v711
  %v713 = vmul.f32 %v677, 1.442695
  %v714 = vpow.pop %v713
  %v715 = vmul.f32 %v678, 1.442695
  %v716 = vpow.pop %v715
  %v717 = vmul.f32 %v679, 1.442695
  %v718 = vpow.pop %v717
  %v719 = vmul.f32 %v680, 1.442695
  %v720 = vpow.pop %v719
  %v721 = vmul.f32 %v681, 1.442695
  %v722 = vpow.pop %v721
  %v723 = vmul.f32 %v682, 1.442695
  %v724 = vpow.pop %v723
  %v725 = vmul.f32 %v683, 1.442695
  %v726 = vpow.pop %v725
  %v727 = vmul.f32 %v684, 1.442695
  %v728 = vpow.pop %v727
  %v729 = vmul.f32 %v685, 1.442695
  %v730 = vpow.pop %v729
  %v731 = vmul.f32 %v686, 1.442695
  %v732 = vpow.pop %v731
  %v733 = vmul.f32 %v687, 1.442695
  %v734 = vpow.pop %v733
  %v735 = vmul.f32 %v688, 1.442695
  %v736 = vpow.pop %v735
  %v737 = vmul.f32 %v689, 1.442695
  %v738 = vpow.pop %v737
  %v739 = vmul.f32 %v690, 1.442695
  %v740 = vpow.pop %v739
  %v741 = vmul.f32 %v691, 1.442695
  %v742 = vpow.pop %v741
  %v743 = vmul.f32 %v692, 1.442695
  %v744 = vpow.pop %v743
  %v745 = vmul.f32 %v693, 1.442695
  %v746 = vpow.pop %v745
  %v747 = vmul.f32 %v694, 1.442695
  %v748 = vpow.pop %v747
  %v749 = vmul.f32 %v695, 1.442695
  %v750 = vpow.pop %v749
  %v751 = vmul.f32 %v696, 1.442695
  %v752 = vpow.pop %v751
  %v753 = vmul.f32 %v697, 1.442695
  %v754 = vpow.pop %v753
  %v755 = vmul.f32 %v698, 1.442695
  %v756 = vpow.pop %v755
  %v757 = vmul.f32 %v699, 1.442695
  %v758 = vpow.pop %v757
  %v759 = vmul.f32 %v700, 1.442695
  %v760 = vpow.pop %v759
  %v761 = vmul.f32 %v701, 1.442695
  %v762 = vpow.pop %v761
  %v763 = vmul.f32 %v702, 1.442695
  %v764 = vpow.pop %v763
  %v765 = vmul.f32 %v703, 1.442695
  %v766 = vpow.pop %v765
  %v767 = vmul.f32 %v704, 1.442695
  %v768 = vpow.pop %v767
  %769 = vadd.xlane.f32.xlu0 %v706
  %v770 = vpop.xlane.xlu0 %769
  %771 = vadd.xlane.f32.xlu0 %v708
  %v772 = vpop.xlane.xlu0 %771
  %773 = vadd.xlane.f32.xlu0 %v710
  %v774 = vpop.xlane.xlu0 %773
  %775 = vadd.xlane.f32.xlu0 %v712
  %v776 = vpop.xlane.xlu0 %775
  %777 = vadd.xlane.f32.xlu0 %v714
  %v778 = vpop.xlane.xlu0 %777
  %779 = vadd.xlane.f32.xlu0 %v716
  %v780 = vpop.xlane.xlu0 %779
  %781 = vadd.xlane.f32.xlu0 %v718
  %v782 = vpop.xlane.xlu0 %781
  %783 = vadd.xlane.f32.xlu0 %v720
  %v784 = vpop.xlane.xlu0 %783
  %785 = vadd.xlane.f32.xlu0 %v722
  %v786 = vpop.xlane.xlu0 %785
  %787 = vadd.xlane.f32.xlu0 %v724
  %v788 = vpop.xlane.xlu0 %787
  %789 = vadd.xlane.f32.xlu0 %v726
  %v790 = vpop.xlane.xlu0 %789
  %791 = vadd.xlane.f32.xlu0 %v728
  %v792 = vpop.xlane.xlu0 %791
  %793 = vadd.xlane.f32.xlu0 %v730
  %v794 = vpop.xlane.xlu0 %793
  %795 = vadd.xlane.f32.xlu0 %v732
  %v796 = vpop.xlane.xlu0 %795
  %797 = vadd.xlane.f32.xlu0 %v734
  %v798 = vpop.xlane.xlu0 %797
  %799 = vadd.xlane.f32.xlu0 %v736
  %v800 = vpop.xlane.xlu0 %799
  %801 = vadd.xlane.f32.xlu0 %v738
  %v802 = vpop.xlane.xlu0 %801
  %803 = vadd.xlane.f32.xlu0 %v740
  %v804 = vpop.xlane.xlu0 %803
  %805 = vadd.xlane.f32.xlu0 %v742
  %v806 = vpop.xlane.xlu0 %805
  %807 = vadd.xlane.f32.xlu0 %v744
  %v808 = vpop.xlane.xlu0 %807
  %809 = vadd.xlane.f32.xlu0 %v746
  %v810 = vpop.xlane.xlu0 %809
  %811 = vadd.xlane.f32.xlu0 %v748
  %v812 = vpop.xlane.xlu0 %811
  %813 = vadd.xlane.f32.xlu0 %v750
  %v814 = vpop.xlane.xlu0 %813
  %815 = vadd.xlane.f32.xlu0 %v752
  %v816 = vpop.xlane.xlu0 %815
  %817 = vadd.xlane.f32.xlu0 %v754
  %v818 = vpop.xlane.xlu0 %817
  %819 = vadd.xlane.f32.xlu0 %v756
  %v820 = vpop.xlane.xlu0 %819
  %821 = vadd.xlane.f32.xlu0 %v758
  %v822 = vpop.xlane.xlu0 %821
  %823 = vadd.xlane.f32.xlu0 %v760
  %v824 = vpop.xlane.xlu0 %823
  %825 = vadd.xlane.f32.xlu0 %v762
  %v826 = vpop.xlane.xlu0 %825
  %827 = vadd.xlane.f32.xlu0 %v764
  %v828 = vpop.xlane.xlu0 %827
  %829 = vadd.xlane.f32.xlu0 %v766
  %v830 = vpop.xlane.xlu0 %829
  %831 = vadd.xlane.f32.xlu0 %v768
  %v832 = vpop.xlane.xlu0 %831
  %v833 = vrcp.pop %v770
  %v834 = vmul.f32 %v706, %v833
  %v835 = vrcp.pop %v772
  %v836 = vmul.f32 %v708, %v835
  %v837 = vrcp.pop %v774
  %v838 = vmul.f32 %v710, %v837
  %v839 = vrcp.pop %v776
  %v840 = vmul.f32 %v712, %v839
  %v841 = vrcp.pop %v778
  %v842 = vmul.f32 %v714, %v841
  %v843 = vrcp.pop %v780
  %v844 = vmul.f32 %v716, %v843
  %v845 = vrcp.pop %v782
  %v846 = vmul.f32 %v718, %v845
  %v847 = vrcp.pop %v784
  %v848 = vmul.f32 %v720, %v847
  %v849 = vrcp.pop %v786
  %v850 = vmul.f32 %v722, %v849
  %v851 = vrcp.pop %v788
  %v852 = vmul.f32 %v724, %v851
  %v853 = vrcp.pop %v790
  %v854 = vmul.f32 %v726, %v853
  %v855 = vrcp.pop %v792
  %v856 = vmul.f32 %v728, %v855
  %v857 = vrcp.pop %v794
  %v858 = vmul.f32 %v730, %v857
  %v859 = vrcp.pop %v796
  %v860 = vmul.f32 %v732, %v859
  %v861 = vrcp.pop %v798
  %v862 = vmul.f32 %v734, %v861
  %v863 = vrcp.pop %v800
  %v864 = vmul.f32 %v736, %v863
  %v865 = vrcp.pop %v802
  %v866 = vmul.f32 %v738, %v865
  %v867 = vrcp.pop %v804
  %v868 = vmul.f32 %v740, %v867
  %v869 = vrcp.pop %v806
  %v870 = vmul.f32 %v742, %v869
  %v871 = vrcp.pop %v808
  %v872 = vmul.f32 %v744, %v871
  %v873 = vrcp.pop %v810
  %v874 = vmul.f32 %v746, %v873
  %v875 = vrcp.pop %v812
  %v876 = vmul.f32 %v748, %v875
  %v877 = vrcp.pop %v814
  %v878 = vmul.f32 %v750, %v877
  %v879 = vrcp.pop %v816
  %v880 = vmul.f32 %v752, %v879
  %v881 = vrcp.pop %v818
  %v882 = vmul.f32 %v754, %v881
  %v883 = vrcp.pop %v820
  %v884 = vmul.f32 %v756, %v883
  %v885 = vrcp.pop %v822
  %v886 = vmul.f32 %v758, %v885
  %v887 = vrcp.pop %v824
  %v888 = vmul.f32 %v760, %v887
  %v889 = vrcp.pop %v826
  %v890 = vmul.f32 %v762, %v889
  %v891 = vrcp.pop %v828
  %v892 = vmul.f32 %v764, %v891
  %v893 = vrcp.pop %v830
  %v894 = vmul.f32 %v766, %v893
  %v895 = vrcp.pop %v832
  %v896 = vmul.f32 %v768, %v895
  %vm897 = vcmp.eq.s32.totalorder %v575, 8
  %v898 = vsel %vm897, %v448, %v834
  %v899 = vsel %vm897, %v451, %v836
  %v900 = vsel %vm897, %v456, %v838
  %v901 = vsel %vm897, %v459, %v840
  %v902 = vsel %vm897, %v464, %v842
  %v903 = vsel %vm897, %v467, %v844
  %v904 = vsel %vm897, %v472, %v846
  %v905 = vsel %vm897, %v475, %v848
  %v906 = vsel %vm897, %v480, %v850
  %v907 = vsel %vm897, %v483, %v852
  %v908 = vsel %vm897, %v488, %v854
  %v909 = vsel %vm897, %v491, %v856
  %v910 = vsel %vm897, %v496, %v858
  %v911 = vsel %vm897, %v499, %v860
  %v912 = vsel %vm897, %v504, %v862
  %v913 = vsel %vm897, %v507, %v864
  %v914 = vsel %vm897, %v512, %v866
  %v915 = vsel %vm897, %v515, %v868
  %v916 = vsel %vm897, %v520, %v870
  %v917 = vsel %vm897, %v523, %v872
  %v918 = vsel %vm897, %v528, %v874
  %v919 = vsel %vm897, %v531, %v876
  %v920 = vsel %vm897, %v536, %v878
  %v921 = vsel %vm897, %v539, %v880
  %v922 = vsel %vm897, %v544, %v882
  %v923 = vsel %vm897, %v547, %v884
  %v924 = vsel %vm897, %v552, %v886
  %v925 = vsel %vm897, %v555, %v888
  %v926 = vsel %vm897, %v560, %v890
  %v927 = vsel %vm897, %v563, %v892
  %v928 = vsel %vm897, %v568, %v894
  %v929 = vsel %vm897, %v571, %v896
  %v930 = vpack.c.bf16 %v899, %v898
  %v931 = vpack.c.bf16 %v901, %v900
  %v932 = vpack.c.bf16 %v903, %v902
  %v933 = vpack.c.bf16 %v905, %v904
  %v934 = vpack.c.bf16 %v907, %v906
  %v935 = vpack.c.bf16 %v909, %v908
  %v936 = vpack.c.bf16 %v911, %v910
  %v937 = vpack.c.bf16 %v913, %v912
  %v938 = vpack.c.bf16 %v915, %v914
  %v939 = vpack.c.bf16 %v917, %v916
  %v940 = vpack.c.bf16 %v919, %v918
  %v941 = vpack.c.bf16 %v921, %v920
  %v942 = vpack.c.bf16 %v923, %v922
  %v943 = vpack.c.bf16 %v925, %v924
  %v944 = vpack.c.bf16 %v927, %v926
  %v945 = vpack.c.bf16 %v929, %v928
  %v962 = vunpack.c.l.b16 %v930
  %v963 = vunpack.c.h.b16 %v930
  %v964 = vunpack.c.l.b16 %v931
  %v965 = vunpack.c.h.b16 %v931
  %v966 = vunpack.c.l.b16 %v932
  %v967 = vunpack.c.h.b16 %v932
  %v968 = vunpack.c.l.b16 %v933
  %v969 = vunpack.c.h.b16 %v933
  %v970 = vunpack.c.l.b16 %v934
  %v971 = vunpack.c.h.b16 %v934
  %v972 = vunpack.c.l.b16 %v935
  %v973 = vunpack.c.h.b16 %v935
  %v974 = vunpack.c.l.b16 %v936
  %v975 = vunpack.c.h.b16 %v936
  %v976 = vunpack.c.l.b16 %v937
  %v977 = vunpack.c.h.b16 %v937
  %v978 = vunpack.c.l.b16 %v938
  %v979 = vunpack.c.h.b16 %v938
  %v980 = vunpack.c.l.b16 %v939
  %v981 = vunpack.c.h.b16 %v939
  %v982 = vunpack.c.l.b16 %v940
  %v983 = vunpack.c.h.b16 %v940
  %v984 = vunpack.c.l.b16 %v941
  %v985 = vunpack.c.h.b16 %v941
  %v986 = vunpack.c.l.b16 %v942
  %v987 = vunpack.c.h.b16 %v942
  %v988 = vunpack.c.l.b16 %v943
  %v989 = vunpack.c.h.b16 %v943
  %v990 = vunpack.c.l.b16 %v944
  %v991 = vunpack.c.h.b16 %v944
  %v992 = vunpack.c.l.b16 %v945
  %v993 = vunpack.c.h.b16 %v945
  %v994 = vpack.c.b16 %v962, %v962
  %v995 = vpack.c.b16 %v963, %v963
  %v996 = vpack.c.b16 %v964, %v964
  %v997 = vpack.c.b16 %v965, %v965
  %v998 = vpack.c.b16 %v966, %v966
  %v999 = vpack.c.b16 %v967, %v967
  %v1000 = vpack.c.b16 %v968, %v968
  %v1001 = vpack.c.b16 %v969, %v969
  %v1002 = vpack.c.b16 %v970, %v970
  %v1003 = vpack.c.b16 %v971, %v971
  %v1004 = vpack.c.b16 %v972, %v972
  %v1005 = vpack.c.b16 %v973, %v973
  %v1006 = vpack.c.b16 %v974, %v974
  %v1007 = vpack.c.b16 %v975, %v975
  %v1008 = vpack.c.b16 %v976, %v976
  %v1009 = vpack.c.b16 %v977, %v977
  %v1010 = vpack.c.b16 %v978, %v978
  %v1011 = vpack.c.b16 %v979, %v979
  %v1012 = vpack.c.b16 %v980, %v980
  %v1013 = vpack.c.b16 %v981, %v981
  %v1014 = vpack.c.b16 %v982, %v982
  %v1015 = vpack.c.b16 %v983, %v983
  %v1016 = vpack.c.b16 %v984, %v984
  %v1017 = vpack.c.b16 %v985, %v985
  %v1018 = vpack.c.b16 %v986, %v986
  %v1019 = vpack.c.b16 %v987, %v987
  %v1020 = vpack.c.b16 %v988, %v988
  %v1021 = vpack.c.b16 %v989, %v989
  %v1022 = vpack.c.b16 %v990, %v990
  %v1023 = vpack.c.b16 %v991, %v991
  %v1024 = vpack.c.b16 %v992, %v992
  %v1025 = vpack.c.b16 %v993, %v993
  %1058 = vst [vmem:[%s3] sm:$0xf] %v994
  %1059 = vst [vmem:[%s3 + $0x4] sm:$0xf] %v995
  %1060 = vst [vmem:[%s3 + $0x8] sm:$0xf] %v996
  %1061 = vst [vmem:[%s3 + $0xc] sm:$0xf] %v997
  %1062 = vst [vmem:[%s3 + $0x10] sm:$0xf] %v998
  %1063 = vst [vmem:[%s3 + $0x14] sm:$0xf] %v999
  %1064 = vst [vmem:[%s3 + $0x18] sm:$0xf] %v1000
  %1065 = vst [vmem:[%s3 + $0x1c] sm:$0xf] %v1001
  %1066 = vst [vmem:[%s3 + $0x20] sm:$0xf] %v1002
  %1067 = vst [vmem:[%s3 + $0x24] sm:$0xf] %v1003
  %1068 = vst [vmem:[%s3 + $0x28] sm:$0xf] %v1004
  %1069 = vst [vmem:[%s3 + $0x2c] sm:$0xf] %v1005
  %1070 = vst [vmem:[%s3 + $0x30] sm:$0xf] %v1006
  %1071 = vst [vmem:[%s3 + $0x34] sm:$0xf] %v1007
  %1072 = vst [vmem:[%s3 + $0x38] sm:$0xf] %v1008
  %1073 = vst [vmem:[%s3 + $0x3c] sm:$0xf] %v1009
  %1074 = vst [vmem:[%s3 + $0x40] sm:$0xf] %v1010
  %1075 = vst [vmem:[%s3 + $0x44] sm:$0xf] %v1011
  %1076 = vst [vmem:[%s3 + $0x48] sm:$0xf] %v1012
  %1077 = vst [vmem:[%s3 + $0x4c] sm:$0xf] %v1013
  %1078 = vst [vmem:[%s3 + $0x50] sm:$0xf] %v1014
  %1079 = vst [vmem:[%s3 + $0x54] sm:$0xf] %v1015
  %1080 = vst [vmem:[%s3 + $0x58] sm:$0xf] %v1016
  %1081 = vst [vmem:[%s3 + $0x5c] sm:$0xf] %v1017
  %1082 = vst [vmem:[%s3 + $0x60] sm:$0xf] %v1018
  %1083 = vst [vmem:[%s3 + $0x64] sm:$0xf] %v1019
  %1084 = vst [vmem:[%s3 + $0x68] sm:$0xf] %v1020
  %1085 = vst [vmem:[%s3 + $0x6c] sm:$0xf] %v1021
  %1086 = vst [vmem:[%s3 + $0x70] sm:$0xf] %v1022
  %1087 = vst [vmem:[%s3 + $0x74] sm:$0xf] %v1023
  %1088 = vst [vmem:[%s3 + $0x78] sm:$0xf] %v1024
  %1089 = vst [vmem:[%s3 + $0x7c] sm:$0xf] %v1025
  // Predicated region
  $region14: #{agent_forward.1} parent=0 // pred_check
    _
  $region15: #{agent_forward.1} parent=0 // pred_check_branch
    %1091 = sbr.rel (0) target = $region17
  $region16: #{agent_forward.1} parent=0 // pred_region
    _
  $region17: #{agent_forward.1} parent=0 // pred_fallthru
    _
  // Predicated region
  $region18: #{agent_forward.1} parent=0 // pred_check
    _
  $region19: #{agent_forward.1} parent=0 // pred_check_branch
    %1093 = sbr.rel (0) target = $region21
  $region20: #{agent_forward.1} parent=0 // pred_region
    _
  $region21: #{agent_forward.1} parent=0 // pred_fallthru
    _

</llo_original>
